<compile_context>
chip_gen: v6e
topology: v6e:2x2x1
jax: 0.10.0
libtpu: 0.0.40
codegen_flags: <defaults>
</compile_context>

<pallas_src>
import functools

import numpy as np
import jax
import jax.numpy as jnp
from jax.experimental import pallas as pl
from jax.experimental.pallas import tpu as pltpu

HIDDEN1 = 256
HIDDEN2 = 128
LANE = 128


def _round_up(n, m):
    return (n + m - 1) // m * m


def _mlp_kernel(x_ref, w1_ref, b1_ref, w2_ref, b2_ref, w3_ref, b3_ref, o_ref):
    # fc1 + ReLU (dropout1 == identity at inference). x arrives f32; cast per-tile for the MXU,
    # accumulate f32. Bias-add / ReLU epilogues stay f32 on the VPU (v5e has no bf16 VALU).
    x = x_ref[...].astype(jnp.bfloat16)
    h1 = jnp.dot(x, w1_ref[...], preferred_element_type=jnp.float32)
    h1 = jnp.maximum(h1 + b1_ref[...], 0.0)
    # fc2 + ReLU (dropout2 == identity at inference)
    h2 = jnp.dot(h1.astype(jnp.bfloat16), w2_ref[...],
                 preferred_element_type=jnp.float32)
    h2 = jnp.maximum(h2 + b2_ref[...], 0.0)
    # fc3 (logits, no activation) -- lane-dense (padded-C) store.
    out = jnp.dot(h2.astype(jnp.bfloat16), w3_ref[...],
                  preferred_element_type=jnp.float32)
    o_ref[...] = (out + b3_ref[...]).astype(o_ref.dtype)


def prepare_params(params):
    """One-time, outside the jitted forward: cast weights to bf16 for the MXU and pad fc3's
    class dim to a lane multiple (lane-dense output stores). Biases stay f32 for the VPU."""
    w3, b3 = params["w3"], params["b3"]
    C = w3.shape[1]
    C_pad = _round_up(C, LANE)
    if C_pad != C:
        w3 = jnp.pad(w3, ((0, 0), (0, C_pad - C)))
        b3 = jnp.pad(b3, ((0, 0), (0, C_pad - C)))
    prepped = {
        "w1": params["w1"].astype(jnp.bfloat16), "b1": params["b1"],
        "w2": params["w2"].astype(jnp.bfloat16), "b2": params["b2"],
        "w3": w3.astype(jnp.bfloat16), "b3": b3,
    }
    return prepped, C


@functools.partial(jax.jit, static_argnames=("num_classes", "block_b", "out_dtype"))
def node_classifier_forward(x, prepped, *, num_classes, block_b=512,
                            out_dtype=jnp.float32):
    """x: [B, input_size] float32. prepped: output of prepare_params. Returns [B, num_classes]."""
    B, D_in = x.shape
    w1, b1 = prepped["w1"], prepped["b1"]
    w2, b2 = prepped["w2"], prepped["b2"]
    w3, b3 = prepped["w3"], prepped["b3"]
    C_pad = w3.shape[1]

    # Batch tile: large (roofline sweet spot >=512), but target >=2 grid steps whenever B allows
    # so v7x's 2 TensorCores both get work and DMA overlaps compute. No batch padding: the
    # boundary block's garbage rows are independent and masked on store.
    if B <= 8:
        eff_b = B                      # full-extent block (legal: equals the array dim)
    else:
        eff_b = max(8, min(block_b, max(8, _round_up((B + 1) // 2, 8))))
    grid = (pl.cdiv(B, eff_b),)

    row = lambda i: (i, 0)             # activations: tile over the batch axis
    full = lambda i: (0, 0)            # weights / biases: same (resident) block every step

    out_bytes = np.dtype(out_dtype).itemsize
    w_bytes = (w1.size + w2.size + w3.size) * 2
    b_bytes = (b1.size + b2.size + b3.size) * 4
    flops = 2 * B * (D_in * HIDDEN1 + HIDDEN1 * HIDDEN2 + HIDDEN2 * C_pad)
    bytes_accessed = (x.size * x.dtype.itemsize + w_bytes + b_bytes
                      + B * C_pad * out_bytes)

    # VMEM budget from the actual footprint (double-buffered IO tiles + resident weights),
    # only raised above the default when genuinely needed (large D_in / batch tile).
    need = 2 * (eff_b * D_in * x.dtype.itemsize      # x tile, double-buffered
                + eff_b * C_pad * out_bytes          # out tile
                + w_bytes + b_bytes)                 # resident (but default double-buffered)
    need += eff_b * (HIDDEN1 + HIDDEN2) * 4          # f32 intermediates
    vmem_limit = min(max(int(need * 1.5) + (8 << 20), 32 << 20), 100 << 20)

    out = pl.pallas_call(
        _mlp_kernel,
        out_shape=jax.ShapeDtypeStruct((B, C_pad), out_dtype),
        grid_spec=pltpu.PrefetchScalarGridSpec(
            num_scalar_prefetch=0,
            grid=grid,
            in_specs=[
                pl.BlockSpec((eff_b, D_in), row),
                pl.BlockSpec((D_in, HIDDEN1), full),
                pl.BlockSpec((1, HIDDEN1), full),
                pl.BlockSpec((HIDDEN1, HIDDEN2), full),
                pl.BlockSpec((1, HIDDEN2), full),
                pl.BlockSpec((HIDDEN2, C_pad), full),
                pl.BlockSpec((1, C_pad), full),
            ],
            out_specs=pl.BlockSpec((eff_b, C_pad), row),
        ),
        compiler_params=pltpu.CompilerParams(
            dimension_semantics=("parallel",),
            vmem_limit_bytes=vmem_limit,
        ),
        cost_estimate=pl.CostEstimate(
            flops=flops, transcendentals=0, bytes_accessed=bytes_accessed),
    )(x, w1, b1, w2, b2, w3, b3)

    if C_pad != num_classes:
        out = out[:, :num_classes]
    return out


def init_params(key, input_size, num_classes):
    """Deterministic init mimicking PyTorch nn.Linear defaults (uniform +/- 1/sqrt(fan_in))."""
    ks = jax.random.split(key, 6)

    def linear(kw, kb, fan_in, fan_out):
        bound = 1.0 / jnp.sqrt(fan_in)
        w = jax.random.uniform(kw, (fan_in, fan_out), jnp.float32, -bound, bound)
        b = jax.random.uniform(kb, (1, fan_out), jnp.float32, -bound, bound)
        return w, b

    w1, b1 = linear(ks[0], ks[1], input_size, HIDDEN1)
    w2, b2 = linear(ks[2], ks[3], HIDDEN1, HIDDEN2)
    w3, b3 = linear(ks[4], ks[5], HIDDEN2, num_classes)
    return {"w1": w1, "b1": b1, "w2": w2, "b2": b2, "w3": w3, "b3": b3}


def reference_forward(x, p):
    # Pure-JAX f32 reference (kernel uses bf16 MXU inputs, hence the loosened tolerance).
    h = jnp.maximum(x @ p["w1"] + p["b1"], 0.0)
    h = jnp.maximum(h @ p["w2"] + p["b2"], 0.0)
    return h @ p["w3"] + p["b3"]


if __name__ == "__main__":
    key = jax.random.PRNGKey(0)
    k_x, k_x2, k_p = jax.random.split(key, 3)

    input_size = 32
    num_classes = 16
    params = init_params(k_p, input_size, num_classes)
    prepped, C = prepare_params(params)

    # Small single-block case.
    batch = 8
    x = jax.random.normal(k_x, (batch, input_size), jnp.float32)
    out = jax.block_until_ready(node_classifier_forward(x, prepped, num_classes=C))
    ref = reference_forward(x, params)
    assert out.shape == (batch, num_classes)
    # bf16 MXU path vs f32 reference: a few % relative error is expected.
    assert jnp.allclose(out, ref, atol=3e-2, rtol=3e-2), "mismatch vs pure-JAX reference"

    # Multi-step grid with a partial boundary block (exercises masked tail stores).
    batch2 = 24
    x2 = jax.random.normal(k_x2, (batch2, input_size), jnp.float32)
    out2 = jax.block_until_ready(node_classifier_forward(x2, prepped, num_classes=C))
    ref2 = reference_forward(x2, params)
    assert out2.shape == (batch2, num_classes)
    assert jnp.allclose(out2, ref2, atol=3e-2, rtol=3e-2), "mismatch on boundary-block case"

    print("KERNEL_OK")
</pallas_src>

<mosaic_0001>
module attributes {stable_mosaic.version = 11 : i64} {
  func.func @_mlp_kernel(%arg0: i32, %arg1: memref<8x32xf32, #tpu.memory_space<vmem>>, %arg2: memref<32x256xbf16, #tpu.memory_space<vmem>>, %arg3: memref<1x256xf32, #tpu.memory_space<vmem>>, %arg4: memref<256x128xbf16, #tpu.memory_space<vmem>>, %arg5: memref<1x128xf32, #tpu.memory_space<vmem>>, %arg6: memref<128x128xbf16, #tpu.memory_space<vmem>>, %arg7: memref<1x128xf32, #tpu.memory_space<vmem>>, %arg8: memref<8x128xf32, #tpu.memory_space<vmem>>) attributes {dimension_semantics = [#tpu.dimension_semantics<parallel>], iteration_bounds = array<i64: 1>, scalar_prefetch = 0 : i64, scratch_operands = 0 : i64, tpu.core_type = #tpu.core_type<tc>, window_params = [{transform_indices = @transform_0, window_bounds = array<i64: 8, 32>}, {pipeline_mode = #tpu.pipeline_mode<synchronous>, transform_indices = @transform_1, window_bounds = array<i64: 32, 256>}, {pipeline_mode = #tpu.pipeline_mode<synchronous>, transform_indices = @transform_2, window_bounds = array<i64: 1, 256>}, {pipeline_mode = #tpu.pipeline_mode<synchronous>, transform_indices = @transform_3, window_bounds = array<i64: 256, 128>}, {pipeline_mode = #tpu.pipeline_mode<synchronous>, transform_indices = @transform_4, window_bounds = array<i64: 1, 128>}, {pipeline_mode = #tpu.pipeline_mode<synchronous>, transform_indices = @transform_5, window_bounds = array<i64: 128, 128>}, {pipeline_mode = #tpu.pipeline_mode<synchronous>, transform_indices = @transform_6, window_bounds = array<i64: 1, 128>}, {transform_indices = @transform_7, window_bounds = array<i64: 8, 128>}]} {
    %c0 = arith.constant 0 : index
    %c0_0 = arith.constant 0 : index
    %0 = vector.load %arg1[%c0, %c0_0] : memref<8x32xf32, #tpu.memory_space<vmem>>, vector<8x32xf32>
    %1 = arith.truncf %0 : vector<8x32xf32> to vector<8x32xbf16>
    %c0_1 = arith.constant 0 : index
    %c0_2 = arith.constant 0 : index
    %2 = vector.load %arg2[%c0_1, %c0_2] : memref<32x256xbf16, #tpu.memory_space<vmem>>, vector<32x256xbf16>
    %cst = arith.constant dense<0.000000e+00> : vector<8x256xf32>
    %3 = tpu.matmul %1, %2, %cst {dimension_numbers = #tpu.dot_dimension_numbers<[1], [0], [0], [1], [0, 0, 1, 1], [], []>} : vector<8x32xbf16>, vector<32x256xbf16>, vector<8x256xf32> -> vector<8x256xf32>
    %c0_3 = arith.constant 0 : index
    %c0_4 = arith.constant 0 : index
    %4 = vector.load %arg3[%c0_3, %c0_4] : memref<1x256xf32, #tpu.memory_space<vmem>>, vector<1x256xf32>
    %5 = vector.broadcast %4 : vector<1x256xf32> to vector<8x256xf32>
    %6 = arith.addf %3, %5 : vector<8x256xf32>
    %cst_5 = arith.constant 0.000000e+00 : f32
    %7 = vector.broadcast %cst_5 : f32 to vector<8x256xf32>
    %8 = arith.maximumf %6, %7 : vector<8x256xf32>
    %9 = arith.truncf %8 : vector<8x256xf32> to vector<8x256xbf16>
    %c0_6 = arith.constant 0 : index
    %c0_7 = arith.constant 0 : index
    %10 = vector.load %arg4[%c0_6, %c0_7] : memref<256x128xbf16, #tpu.memory_space<vmem>>, vector<256x128xbf16>
    %cst_8 = arith.constant dense<0.000000e+00> : vector<8x128xf32>
    %11 = tpu.matmul %9, %10, %cst_8 {dimension_numbers = #tpu.dot_dimension_numbers<[1], [0], [0], [1], [0, 0, 1, 1], [], []>} : vector<8x256xbf16>, vector<256x128xbf16>, vector<8x128xf32> -> vector<8x128xf32>
    %c0_9 = arith.constant 0 : index
    %c0_10 = arith.constant 0 : index
    %12 = vector.load %arg5[%c0_9, %c0_10] : memref<1x128xf32, #tpu.memory_space<vmem>>, vector<1x128xf32>
    %13 = vector.broadcast %12 : vector<1x128xf32> to vector<8x128xf32>
    %14 = arith.addf %11, %13 : vector<8x128xf32>
    %cst_11 = arith.constant 0.000000e+00 : f32
    %15 = vector.broadcast %cst_11 : f32 to vector<8x128xf32>
    %16 = arith.maximumf %14, %15 : vector<8x128xf32>
    %17 = arith.truncf %16 : vector<8x128xf32> to vector<8x128xbf16>
    %c0_12 = arith.constant 0 : index
    %c0_13 = arith.constant 0 : index
    %18 = vector.load %arg6[%c0_12, %c0_13] : memref<128x128xbf16, #tpu.memory_space<vmem>>, vector<128x128xbf16>
    %cst_14 = arith.constant dense<0.000000e+00> : vector<8x128xf32>
    %19 = tpu.matmul %17, %18, %cst_14 {dimension_numbers = #tpu.dot_dimension_numbers<[1], [0], [0], [1], [0, 0, 1, 1], [], []>} : vector<8x128xbf16>, vector<128x128xbf16>, vector<8x128xf32> -> vector<8x128xf32>
    %c0_15 = arith.constant 0 : index
    %c0_16 = arith.constant 0 : index
    %20 = vector.load %arg7[%c0_15, %c0_16] : memref<1x128xf32, #tpu.memory_space<vmem>>, vector<1x128xf32>
    %21 = vector.broadcast %20 : vector<1x128xf32> to vector<8x128xf32>
    %22 = arith.addf %19, %21 : vector<8x128xf32>
    %c0_17 = arith.constant 0 : index
    %c0_18 = arith.constant 0 : index
    %23 = vector.load %arg8[%c0_17, %c0_18] : memref<8x128xf32, #tpu.memory_space<vmem>>, vector<8x128xf32>
    tpu.vector_store %arg8[%c0_17, %c0_18], %22 {strides = array<i32>} : memref<8x128xf32, #tpu.memory_space<vmem>>, vector<8x128xf32>,
    return
  }
  func.func @transform_0(%arg0: i32) -> (i32, i32) {
    %c0_i32 = arith.constant 0 : i32
    %c0_i32_0 = arith.constant 0 : i32
    return %arg0, %c0_i32 : i32, i32
  }
  func.func @transform_1(%arg0: i32) -> (i32, i32) {
    %c0_i32 = arith.constant 0 : i32
    %c0_i32_0 = arith.constant 0 : i32
    %c0_i32_1 = arith.constant 0 : i32
    return %c0_i32, %c0_i32_0 : i32, i32
  }
  func.func @transform_2(%arg0: i32) -> (i32, i32) {
    %c0_i32 = arith.constant 0 : i32
    %c0_i32_0 = arith.constant 0 : i32
    %c0_i32_1 = arith.constant 0 : i32
    return %c0_i32, %c0_i32_0 : i32, i32
  }
  func.func @transform_3(%arg0: i32) -> (i32, i32) {
    %c0_i32 = arith.constant 0 : i32
    %c0_i32_0 = arith.constant 0 : i32
    %c0_i32_1 = arith.constant 0 : i32
    return %c0_i32, %c0_i32_0 : i32, i32
  }
  func.func @transform_4(%arg0: i32) -> (i32, i32) {
    %c0_i32 = arith.constant 0 : i32
    %c0_i32_0 = arith.constant 0 : i32
    %c0_i32_1 = arith.constant 0 : i32
    return %c0_i32, %c0_i32_0 : i32, i32
  }
  func.func @transform_5(%arg0: i32) -> (i32, i32) {
    %c0_i32 = arith.constant 0 : i32
    %c0_i32_0 = arith.constant 0 : i32
    %c0_i32_1 = arith.constant 0 : i32
    return %c0_i32, %c0_i32_0 : i32, i32
  }
  func.func @transform_6(%arg0: i32) -> (i32, i32) {
    %c0_i32 = arith.constant 0 : i32
    %c0_i32_0 = arith.constant 0 : i32
    %c0_i32_1 = arith.constant 0 : i32
    return %c0_i32, %c0_i32_0 : i32, i32
  }
  func.func @transform_7(%arg0: i32) -> (i32, i32) {
    %c0_i32 = arith.constant 0 : i32
    %c0_i32_0 = arith.constant 0 : i32
    return %arg0, %c0_i32 : i32, i32
  }
}

</mosaic_0001>

<llo_original>
// kernel: node_classifier_forward.1
$region0: #{node_classifier_forward.1}
  #allocation0 [shape = 'u32[]', space=smem, size = 0x4, offset = 0x4, fixed_abs, tag = 'smem constant byte address 0x4 - core index']
  #allocation1 [shape = 'u32[144,128]{1,0:T(1,128)}', space=vmem, size = 0x12000, scoped, tag = 'internal scratch']
  %s0 = inlined_call_operand.hbm [shape: f32[8,32], index: 0, kind: input, shape index: {}]
  %s1 = inlined_call_operand.hbm [shape: bf16[32,256], index: 1, kind: input, shape index: {}]
  %s2 = inlined_call_operand.hbm [shape: f32[1,256], index: 2, kind: input, shape index: {}]
  %s3 = inlined_call_operand.hbm [shape: bf16[256,128], index: 3, kind: input, shape index: {}]
  %s4 = inlined_call_operand.vmem [shape: f32[1,128], index: 4, kind: input, shape index: {}]
  %s5 = inlined_call_operand.hbm [shape: bf16[128,128], index: 5, kind: input, shape index: {}]
  %s6 = inlined_call_operand.vmem [shape: f32[1,128], index: 6, kind: input, shape index: {}]
  %s7 = inlined_call_operand.hbm [shape: f32[8,128], index: 7, kind: output, shape index: {}]
  %s8 = sld [smem:[#allocation0]]
  $region58: #{node_classifier_forward.1} parent=0
    _
  %s10 = ssub.s32 1, %s8
  %s11 = scalar_select 0, %s10, %s8
  $region1: #{node_classifier_forward.1} parent=0
    #allocation2 [shape = 'u8[4096]{0}', space=vmem, size = 0x1000, scoped, tag = 'input window, operand 0, single buffered']
    #allocation3 [shape = 's32[1]{0}', space=sflag, size = 0x4, scoped, tag = 'scoped memory for node_classifier_forward.1']
    #allocation4 [shape = 's32[1]{0}', space=sflag, size = 0x4, scoped, tag = 'scoped memory for node_classifier_forward.1']
    #allocation5 [shape = 'u8[16384]{0}', space=vmem, size = 0x4000, scoped, tag = 'input window, operand 1, single buffered']
    #allocation6 [shape = 's32[1]{0}', space=sflag, size = 0x4, scoped, tag = 'scoped memory for node_classifier_forward.1']
    #allocation7 [shape = 'u8[1024]{0}', space=vmem, size = 0x400, scoped, tag = 'input window, operand 2, single buffered']
    #allocation8 [shape = 'u8[65536]{0}', space=vmem, size = 0x10000, scoped, tag = 'input window, operand 3, single buffered']
    #allocation9 [shape = 's32[1]{0}', space=sflag, size = 0x4, scoped, tag = 'scoped memory for node_classifier_forward.1']
    #allocation10 [shape = 'u8[32768]{0}', space=vmem, size = 0x8000, scoped, tag = 'input window, operand 5, single buffered']
    #allocation11 [shape = 'u8[4096]{0}', space=vmem, size = 0x1000, scoped, tag = 'output window, operand 0, single buffered']
    %12 = vsyncpa [#allocation3], 0
    %13 = vsyncpa [#allocation6], 0
    %14 = vsyncpa [#allocation9], 0
    %15 = vsyncpa [#allocation4], 0
    // Predicated region
    $region2: #{node_classifier_forward.1} parent=1 // pred_check
      _
    $region3: #{node_classifier_forward.1} parent=1 // pred_check_branch
      %17 = sbr.rel (0) target = $region5
    $region4: #{node_classifier_forward.1} parent=1 // pred_region
      %s19 = ssub.s32 128, 128
      %20 = vsyncadd [#allocation3], %s19
      %s22 = sshll.u32 [#allocation2], 4
      %s23 = int_to_ptr.vmem [resolvable:$true] %s22
      %25 = dma.hbm_to_vmem [thread:$0]  %s0, 128, %s23, [#allocation3]
    $region5: #{node_classifier_forward.1} parent=1 // pred_fallthru
      _
    // Predicated region
    $region6: #{node_classifier_forward.1} parent=1 // pred_check
      _
    $region7: #{node_classifier_forward.1} parent=1 // pred_check_branch
      %27 = sbr.rel (0) target = $region9
    $region8: #{node_classifier_forward.1} parent=1 // pred_region
      %s29 = ssub.s32 512, 512
      %30 = vsyncadd [#allocation6], %s29
      %s31 = sshll.u32 [#allocation5], 4
      %s32 = int_to_ptr.vmem [resolvable:$true] %s31
      %37 = dma.hbm_to_vmem [thread:$0]  %s1, 512, %s32, [#allocation6], 128, 128, 8
    $region9: #{node_classifier_forward.1} parent=1 // pred_fallthru
      _
    // Predicated region
    $region10: #{node_classifier_forward.1} parent=1 // pred_check
      _
    $region11: #{node_classifier_forward.1} parent=1 // pred_check_branch
      %39 = sbr.rel (0) target = $region13
    $region12: #{node_classifier_forward.1} parent=1 // pred_region
      %s41 = ssub.s32 32, 32
      %42 = vsyncadd [#allocation6], %s41
      %s44 = sshll.u32 [#allocation7], 4
      %s45 = int_to_ptr.vmem [resolvable:$true] %s44
      %47 = dma.hbm_to_vmem [thread:$0]  %s2, 32, %s45, [#allocation6]
    $region13: #{node_classifier_forward.1} parent=1 // pred_fallthru
      _
    // Predicated region
    $region14: #{node_classifier_forward.1} parent=1 // pred_check
      _
    $region15: #{node_classifier_forward.1} parent=1 // pred_check_branch
      %49 = sbr.rel (0) target = $region17
    $region16: #{node_classifier_forward.1} parent=1 // pred_region
      %s51 = ssub.s32 2048, 2048
      %52 = vsyncadd [#allocation9], %s51
      %s53 = sshll.u32 [#allocation8], 4
      %s54 = int_to_ptr.vmem [resolvable:$true] %s53
      %59 = dma.hbm_to_vmem [thread:$0]  %s3, 2048, %s54, [#allocation9], 64, 64, 4
    $region17: #{node_classifier_forward.1} parent=1 // pred_fallthru
      _
    // Predicated region
    $region18: #{node_classifier_forward.1} parent=1 // pred_check
      _
    $region19: #{node_classifier_forward.1} parent=1 // pred_check_branch
      %61 = sbr.rel (0) target = $region21
    $region20: #{node_classifier_forward.1} parent=1 // pred_region
      _
    $region21: #{node_classifier_forward.1} parent=1 // pred_fallthru
      _
    // Predicated region
    $region22: #{node_classifier_forward.1} parent=1 // pred_check
      _
    $region23: #{node_classifier_forward.1} parent=1 // pred_check_branch
      %63 = sbr.rel (0) target = $region25
    $region24: #{node_classifier_forward.1} parent=1 // pred_region
      %s65 = ssub.s32 1024, 1024
      %66 = vsyncadd [#allocation9], %s65
      %s67 = sshll.u32 [#allocation10], 4
      %s68 = int_to_ptr.vmem [resolvable:$true] %s67
      %73 = dma.hbm_to_vmem [thread:$0]  %s5, 1024, %s68, [#allocation9], 64, 64, 4
    $region25: #{node_classifier_forward.1} parent=1 // pred_fallthru
      _
    // Predicated region
    $region26: #{node_classifier_forward.1} parent=1 // pred_check
      _
    $region27: #{node_classifier_forward.1} parent=1 // pred_check_branch
      %75 = sbr.rel (0) target = $region29
    $region28: #{node_classifier_forward.1} parent=1 // pred_region
      _
    $region29: #{node_classifier_forward.1} parent=1 // pred_fallthru
      _
    // Predicated region
    $region30: #{node_classifier_forward.1} parent=1 // pred_check
      _
    $region31: #{node_classifier_forward.1} parent=1 // pred_check_branch
      %77 = sbr.rel (0) target = $region33
    $region32: #{node_classifier_forward.1} parent=1 // pred_region
      %78 = dma.done [#allocation3], 128
    $region33: #{node_classifier_forward.1} parent=1 // pred_fallthru
      _
    // Predicated region
    $region34: #{node_classifier_forward.1} parent=1 // pred_check
      _
    $region35: #{node_classifier_forward.1} parent=1 // pred_check_branch
      %80 = sbr.rel (0) target = $region37
    $region36: #{node_classifier_forward.1} parent=1 // pred_region
      %81 = dma.done [#allocation6], 512
    $region37: #{node_classifier_forward.1} parent=1 // pred_fallthru
      _
    // Predicated region
    $region38: #{node_classifier_forward.1} parent=1 // pred_check
      _
    $region39: #{node_classifier_forward.1} parent=1 // pred_check_branch
      %83 = sbr.rel (0) target = $region41
    $region40: #{node_classifier_forward.1} parent=1 // pred_region
      %84 = dma.done [#allocation6], 32
    $region41: #{node_classifier_forward.1} parent=1 // pred_fallthru
      _
    // Predicated region
    $region42: #{node_classifier_forward.1} parent=1 // pred_check
      _
    $region43: #{node_classifier_forward.1} parent=1 // pred_check_branch
      %86 = sbr.rel (0) target = $region45
    $region44: #{node_classifier_forward.1} parent=1 // pred_region
      %87 = dma.done [#allocation9], 2048
    $region45: #{node_classifier_forward.1} parent=1 // pred_fallthru
      _
    // Predicated region
    $region46: #{node_classifier_forward.1} parent=1 // pred_check
      _
    $region47: #{node_classifier_forward.1} parent=1 // pred_check_branch
      %89 = sbr.rel (0) target = $region49
    $region48: #{node_classifier_forward.1} parent=1 // pred_region
      %90 = dma.done [#allocation9], 1024
    $region49: #{node_classifier_forward.1} parent=1 // pred_fallthru
      _
    %v92 = vld [vmem:[#allocation2] sm:$0xff]
    %v93 = vpack.c.bf16 %v92, %v92
    %v94 = vld [vmem:[#allocation5] sm:$0xff]
    %v95 = vld [vmem:[#allocation5 + $0x8] sm:$0xff]
    %v96 = vld [vmem:[#allocation5 + $0x10] sm:$0xff]
    %v97 = vld [vmem:[#allocation5 + $0x18] sm:$0xff]
    %v98 = vld [vmem:[#allocation7] sm:$0x3]
    %v100 = vlaneseq
    %v101 = vshrl.u32 %v100, 7
    %v102 = vsub.s32 0, %v101
    %v103 = vrot.slane %v98, %v102
    %v104 = vlaneseq
    %v105 = vshrl.u32 %v104, 7
    %v106 = vsub.s32 1, %v105
    %v107 = vrot.slane %v98, %v106
    %v114 = vunpack.c.l.b16 %v94
    %v115 = vunpack.c.h.b16 %v94
    %v116 = vunpack.c.l.b16 %v95
    %v117 = vunpack.c.h.b16 %v95
    %v118 = vunpack.c.l.b16 %v96
    %v119 = vunpack.c.h.b16 %v96
    %v120 = vunpack.c.l.b16 %v97
    %v121 = vunpack.c.h.b16 %v97
    %v122 = vpack.c.b16 %v116, %v114
    %v123 = vpack.c.b16 %v117, %v115
    %v124 = vpack.c.b16 %v120, %v118
    %v125 = vpack.c.b16 %v121, %v119
    %vm130 = vcmask 261120
    %v132 = vsel %vm130, %v93, 0
    %134 = vmatprep.subr.bf16.mxu0 0
    %135 = vmatpush1.bf16.msra.mxu0 0
    %136 = vmatprep.subr.bf16.mxu0 0
    %137 = vmatpush1.bf16.msra.mxu0 0
    %138 = vmatprep.subr.bf16.mxu0 0
    %139 = vmatpush1.bf16.msra.mxu0 0
    %140 = vmatprep.subr.bf16.mxu0 0
    %141 = vmatpush1.bf16.msra.mxu0 0
    %142 = vmatprep.subr.bf16.mxu0 0
    %143 = vmatpush1.bf16.msra.mxu0 0
    %144 = vmatprep.subr.bf16.mxu0 0
    %145 = vmatpush1.bf16.msra.mxu0 0
    %146 = vmatprep.subr.bf16.mxu0 %v125
    %147 = vmatpush1.bf16.msra.mxu0 %v124
    %148 = vmatprep.subr.bf16.mxu0 %v123
    %149 = vmatpush1.bf16.msra.mxu0 %v122
    %150 = vmatprep.subr.bf16.mxu0 0
    %151 = vmatpush2.bf16.msra.mxu0 0
    %152 = vmatprep.subr.bf16.mxu0 0
    %153 = vmatpush2.bf16.msra.mxu0 0
    %154 = vmatprep.subr.bf16.mxu0 0
    %155 = vmatpush2.bf16.msra.mxu0 0
    %156 = vmatprep.subr.bf16.mxu0 0
    %157 = vmatpush2.bf16.msra.mxu0 0
    %158 = vmatprep.subr.bf16.mxu0 0
    %159 = vmatpush2.bf16.msra.mxu0 0
    %160 = vmatprep.subr.bf16.mxu0 0
    %161 = vmatpush2.bf16.msra.mxu0 0
    %162 = vmatprep.subr.bf16.mxu0 0
    %163 = vmatpush2.bf16.msra.mxu0 0
    %164 = vmatprep.subr.bf16.mxu0 0
    %165 = vmatpush2.bf16.msra.mxu0 0
    %166 = vmatprep.mubr.bf16.mxu0 0
    %167 = vmatmul.mubr.bf16.gmra.mxu0 %v132
    %v168 = vpop.f32.mrf.mxu0
    %v169 = vadd.f32 %v103, %v168
    %v170 = vpop.f32.mrf.mxu0
    %v171 = vadd.f32 %v107, %v170
    %v172 = vpop.f32.mrf.mxu0
    %v173 = vpop.f32.mrf.mxu0
    %174 = vdwg.mxu0
    %v175 = vmax.f32 %v169, 0.0
    %v176 = vmax.f32 %v171, 0.0
    %v177 = vpack.c.bf16 %v175, %v175
    %v178 = vpack.c.bf16 %v176, %v176
    %v179 = vld [vmem:[#allocation8] sm:$0xf]
    %v180 = vld [vmem:[#allocation8 + $0x4] sm:$0xf]
    %v181 = vld [vmem:[#allocation8 + $0x8] sm:$0xf]
    %v182 = vld [vmem:[#allocation8 + $0xc] sm:$0xf]
    %v183 = vld [vmem:[#allocation8 + $0x10] sm:$0xf]
    %v184 = vld [vmem:[#allocation8 + $0x14] sm:$0xf]
    %v185 = vld [vmem:[#allocation8 + $0x18] sm:$0xf]
    %v186 = vld [vmem:[#allocation8 + $0x1c] sm:$0xf]
    %v187 = vld [vmem:[#allocation8 + $0x20] sm:$0xf]
    %v188 = vld [vmem:[#allocation8 + $0x24] sm:$0xf]
    %v189 = vld [vmem:[#allocation8 + $0x28] sm:$0xf]
    %v190 = vld [vmem:[#allocation8 + $0x2c] sm:$0xf]
    %v191 = vld [vmem:[#allocation8 + $0x30] sm:$0xf]
    %v192 = vld [vmem:[#allocation8 + $0x34] sm:$0xf]
    %v193 = vld [vmem:[#allocation8 + $0x38] sm:$0xf]
    %v194 = vld [vmem:[#allocation8 + $0x3c] sm:$0xf]
    %v195 = vld [vmem:[#allocation8 + $0x40] sm:$0xf]
    %v196 = vld [vmem:[#allocation8 + $0x44] sm:$0xf]
    %v197 = vld [vmem:[#allocation8 + $0x48] sm:$0xf]
    %v198 = vld [vmem:[#allocation8 + $0x4c] sm:$0xf]
    %v199 = vld [vmem:[#allocation8 + $0x50] sm:$0xf]
    %v200 = vld [vmem:[#allocation8 + $0x54] sm:$0xf]
    %v201 = vld [vmem:[#allocation8 + $0x58] sm:$0xf]
    %v202 = vld [vmem:[#allocation8 + $0x5c] sm:$0xf]
    %v203 = vld [vmem:[#allocation8 + $0x60] sm:$0xf]
    %v204 = vld [vmem:[#allocation8 + $0x64] sm:$0xf]
    %v205 = vld [vmem:[#allocation8 + $0x68] sm:$0xf]
    %v206 = vld [vmem:[#allocation8 + $0x6c] sm:$0xf]
    %v207 = vld [vmem:[#allocation8 + $0x70] sm:$0xf]
    %v208 = vld [vmem:[#allocation8 + $0x74] sm:$0xf]
    %v209 = vld [vmem:[#allocation8 + $0x78] sm:$0xf]
    %v210 = vld [vmem:[#allocation8 + $0x7c] sm:$0xf]
    %v211 = vld [vmem:[%s4] sm:$0x1]
    %v213 = vlaneseq
    %v214 = vshrl.u32 %v213, 7
    %v215 = vsub.s32 0, %v214
    %v216 = vrot.slane %v211, %v215
    %v250 = vunpack.c.l.b16 %v179
    %v251 = vunpack.c.l.b16 %v180
    %v252 = vunpack.c.l.b16 %v181
    %v253 = vunpack.c.l.b16 %v182
    %v254 = vunpack.c.l.b16 %v183
    %v255 = vunpack.c.l.b16 %v184
    %v256 = vunpack.c.l.b16 %v185
    %v257 = vunpack.c.l.b16 %v186
    %v258 = vunpack.c.l.b16 %v187
    %v259 = vunpack.c.l.b16 %v188
    %v260 = vunpack.c.l.b16 %v189
    %v261 = vunpack.c.l.b16 %v190
    %v262 = vunpack.c.l.b16 %v191
    %v263 = vunpack.c.l.b16 %v192
    %v264 = vunpack.c.l.b16 %v193
    %v265 = vunpack.c.l.b16 %v194
    %v266 = vunpack.c.l.b16 %v195
    %v267 = vunpack.c.l.b16 %v196
    %v268 = vunpack.c.l.b16 %v197
    %v269 = vunpack.c.l.b16 %v198
    %v270 = vunpack.c.l.b16 %v199
    %v271 = vunpack.c.l.b16 %v200
    %v272 = vunpack.c.l.b16 %v201
    %v273 = vunpack.c.l.b16 %v202
    %v274 = vunpack.c.l.b16 %v203
    %v275 = vunpack.c.l.b16 %v204
    %v276 = vunpack.c.l.b16 %v205
    %v277 = vunpack.c.l.b16 %v206
    %v278 = vunpack.c.l.b16 %v207
    %v279 = vunpack.c.l.b16 %v208
    %v280 = vunpack.c.l.b16 %v209
    %v281 = vunpack.c.l.b16 %v210
    %v282 = vpack.c.b16 %v251, %v250
    %v283 = vpack.c.b16 %v253, %v252
    %v284 = vpack.c.b16 %v255, %v254
    %v285 = vpack.c.b16 %v257, %v256
    %v286 = vpack.c.b16 %v259, %v258
    %v287 = vpack.c.b16 %v261, %v260
    %v288 = vpack.c.b16 %v263, %v262
    %v289 = vpack.c.b16 %v265, %v264
    %v290 = vpack.c.b16 %v267, %v266
    %v291 = vpack.c.b16 %v269, %v268
    %v292 = vpack.c.b16 %v271, %v270
    %v293 = vpack.c.b16 %v273, %v272
    %v294 = vpack.c.b16 %v275, %v274
    %v295 = vpack.c.b16 %v277, %v276
    %v296 = vpack.c.b16 %v279, %v278
    %v297 = vpack.c.b16 %v281, %v280
    %314 = vmatprep.subr.bf16.mxu0 0
    %315 = vmatpush1.bf16.msra.mxu0 %v289
    %316 = vmatprep.subr.bf16.mxu0 0
    %317 = vmatpush1.bf16.msra.mxu0 %v288
    %318 = vmatprep.subr.bf16.mxu0 0
    %319 = vmatpush1.bf16.msra.mxu0 %v287
    %320 = vmatprep.subr.bf16.mxu0 0
    %321 = vmatpush1.bf16.msra.mxu0 %v286
    %322 = vmatprep.subr.bf16.mxu0 0
    %323 = vmatpush1.bf16.msra.mxu0 %v285
    %324 = vmatprep.subr.bf16.mxu0 0
    %325 = vmatpush1.bf16.msra.mxu0 %v284
    %326 = vmatprep.subr.bf16.mxu0 0
    %327 = vmatpush1.bf16.msra.mxu0 %v283
    %328 = vmatprep.subr.bf16.mxu0 0
    %329 = vmatpush1.bf16.msra.mxu0 %v282
    %330 = vmatprep.subr.bf16.mxu0 0
    %331 = vmatpush2.bf16.msra.mxu0 %v297
    %332 = vmatprep.subr.bf16.mxu0 0
    %333 = vmatpush2.bf16.msra.mxu0 %v296
    %334 = vmatprep.subr.bf16.mxu0 0
    %335 = vmatpush2.bf16.msra.mxu0 %v295
    %336 = vmatprep.subr.bf16.mxu0 0
    %337 = vmatpush2.bf16.msra.mxu0 %v294
    %338 = vmatprep.subr.bf16.mxu0 0
    %339 = vmatpush2.bf16.msra.mxu0 %v293
    %340 = vmatprep.subr.bf16.mxu0 0
    %341 = vmatpush2.bf16.msra.mxu0 %v292
    %342 = vmatprep.subr.bf16.mxu0 0
    %343 = vmatpush2.bf16.msra.mxu0 %v291
    %344 = vmatprep.subr.bf16.mxu0 0
    %345 = vmatpush2.bf16.msra.mxu0 %v290
    %346 = vmatprep.mubr.bf16.mxu0 %v178
    %347 = vmatmul.mubr.bf16.gmra.mxu0 %v177
    %v348 = vpop.f32.mrf.mxu0
    %v349 = vadd.f32 %v216, %v348
    %v350 = vpop.f32.mrf.mxu0
    %v351 = vpop.f32.mrf.mxu0
    %v352 = vpop.f32.mrf.mxu0
    %353 = vdwg.mxu0
    %v354 = vmax.f32 %v349, 0.0
    %v355 = vpack.c.bf16 %v354, %v354
    %v356 = vld [vmem:[#allocation10] sm:$0xf]
    %v357 = vld [vmem:[#allocation10 + $0x4] sm:$0xf]
    %v358 = vld [vmem:[#allocation10 + $0x8] sm:$0xf]
    %v359 = vld [vmem:[#allocation10 + $0xc] sm:$0xf]
    %v360 = vld [vmem:[#allocation10 + $0x10] sm:$0xf]
    %v361 = vld [vmem:[#allocation10 + $0x14] sm:$0xf]
    %v362 = vld [vmem:[#allocation10 + $0x18] sm:$0xf]
    %v363 = vld [vmem:[#allocation10 + $0x1c] sm:$0xf]
    %v364 = vld [vmem:[#allocation10 + $0x20] sm:$0xf]
    %v365 = vld [vmem:[#allocation10 + $0x24] sm:$0xf]
    %v366 = vld [vmem:[#allocation10 + $0x28] sm:$0xf]
    %v367 = vld [vmem:[#allocation10 + $0x2c] sm:$0xf]
    %v368 = vld [vmem:[#allocation10 + $0x30] sm:$0xf]
    %v369 = vld [vmem:[#allocation10 + $0x34] sm:$0xf]
    %v370 = vld [vmem:[#allocation10 + $0x38] sm:$0xf]
    %v371 = vld [vmem:[#allocation10 + $0x3c] sm:$0xf]
    %v372 = vld [vmem:[%s6] sm:$0x1]
    %v374 = vlaneseq
    %v375 = vshrl.u32 %v374, 7
    %v376 = vsub.s32 0, %v375
    %v377 = vrot.slane %v372, %v376
    %v395 = vunpack.c.l.b16 %v356
    %v396 = vunpack.c.l.b16 %v357
    %v397 = vunpack.c.l.b16 %v358
    %v398 = vunpack.c.l.b16 %v359
    %v399 = vunpack.c.l.b16 %v360
    %v400 = vunpack.c.l.b16 %v361
    %v401 = vunpack.c.l.b16 %v362
    %v402 = vunpack.c.l.b16 %v363
    %v403 = vunpack.c.l.b16 %v364
    %v404 = vunpack.c.l.b16 %v365
    %v405 = vunpack.c.l.b16 %v366
    %v406 = vunpack.c.l.b16 %v367
    %v407 = vunpack.c.l.b16 %v368
    %v408 = vunpack.c.l.b16 %v369
    %v409 = vunpack.c.l.b16 %v370
    %v410 = vunpack.c.l.b16 %v371
    %v411 = vpack.c.b16 %v396, %v395
    %v412 = vpack.c.b16 %v398, %v397
    %v413 = vpack.c.b16 %v400, %v399
    %v414 = vpack.c.b16 %v402, %v401
    %v415 = vpack.c.b16 %v404, %v403
    %v416 = vpack.c.b16 %v406, %v405
    %v417 = vpack.c.b16 %v408, %v407
    %v418 = vpack.c.b16 %v410, %v409
    %427 = vmatprep.subr.bf16.mxu0 0
    %428 = vmatpush1.bf16.msra.mxu0 %v418
    %429 = vmatprep.subr.bf16.mxu0 0
    %430 = vmatpush1.bf16.msra.mxu0 %v417
    %431 = vmatprep.subr.bf16.mxu0 0
    %432 = vmatpush1.bf16.msra.mxu0 %v416
    %433 = vmatprep.subr.bf16.mxu0 0
    %434 = vmatpush1.bf16.msra.mxu0 %v415
    %435 = vmatprep.subr.bf16.mxu0 0
    %436 = vmatpush1.bf16.msra.mxu0 %v414
    %437 = vmatprep.subr.bf16.mxu0 0
    %438 = vmatpush1.bf16.msra.mxu0 %v413
    %439 = vmatprep.subr.bf16.mxu0 0
    %440 = vmatpush1.bf16.msra.mxu0 %v412
    %441 = vmatprep.subr.bf16.mxu0 0
    %442 = vmatpush1.bf16.msra.mxu0 %v411
    %443 = vmatprep.subr.bf16.mxu0 0
    %444 = vmatpush2.bf16.msra.mxu0 0
    %445 = vmatprep.subr.bf16.mxu0 0
    %446 = vmatpush2.bf16.msra.mxu0 0
    %447 = vmatprep.subr.bf16.mxu0 0
    %448 = vmatpush2.bf16.msra.mxu0 0
    %449 = vmatprep.subr.bf16.mxu0 0
    %450 = vmatpush2.bf16.msra.mxu0 0
    %451 = vmatprep.subr.bf16.mxu0 0
    %452 = vmatpush2.bf16.msra.mxu0 0
    %453 = vmatprep.subr.bf16.mxu0 0
    %454 = vmatpush2.bf16.msra.mxu0 0
    %455 = vmatprep.subr.bf16.mxu0 0
    %456 = vmatpush2.bf16.msra.mxu0 0
    %457 = vmatprep.subr.bf16.mxu0 0
    %458 = vmatpush2.bf16.msra.mxu0 0
    %459 = vmatprep.mubr.bf16.mxu0 0
    %460 = vmatmul.mubr.bf16.gmra.mxu0 %v355
    %v461 = vpop.f32.mrf.mxu0
    %v462 = vadd.f32 %v377, %v461
    %v463 = vpop.f32.mrf.mxu0
    %v464 = vpop.f32.mrf.mxu0
    %v465 = vpop.f32.mrf.mxu0
    %466 = vdwg.mxu0
    %467 = vst [vmem:[#allocation11] sm:$0xff] %v462
    // Predicated region
    $region50: #{node_classifier_forward.1} parent=1 // pred_check
      _
    $region51: #{node_classifier_forward.1} parent=1 // pred_check_branch
      %469 = sbr.rel (0) target = $region53
    $region52: #{node_classifier_forward.1} parent=1 // pred_region
      %s471 = ssub.s32 128, 128
      %472 = vsyncadd [#allocation4], %s471
      %s474 = sshll.u32 [#allocation11], 4
      %s475 = int_to_ptr.vmem [resolvable:$true] %s474
      %477 = dma.vmem_to_hbm [thread:$0]  %s475, 128, %s7, [#allocation4]
    $region53: #{node_classifier_forward.1} parent=1 // pred_fallthru
      _
    // Predicated region
    $region54: #{node_classifier_forward.1} parent=1 // pred_check
      _
    $region55: #{node_classifier_forward.1} parent=1 // pred_check_branch
      %479 = sbr.rel (0) target = $region57
    $region56: #{node_classifier_forward.1} parent=1 // pred_region
      %480 = dma.done [#allocation4], 128
    $region57: #{node_classifier_forward.1} parent=1 // pred_fallthru
      _
    %481 = vsyncpa [#allocation3], 1
    %482 = vsyncpa [#allocation6], 1
    %483 = vsyncpa [#allocation9], 1
    %484 = vsyncpa [#allocation4], 1

</llo_original>
